<compile_context>
chip_gen: v6e
topology: v6e:2x2x1
jax: 0.10.0
libtpu: 0.0.40
codegen_flags: <defaults>
</compile_context>

<pallas_src>
import functools

import jax
import jax.numpy as jnp
from jax.experimental import pallas as pl
from jax.experimental.pallas import tpu as pltpu


def _membership_kernel(x_ref, c_ref, s_ref, out_ref, *, num_rules):
    # x_ref:   (TB, D)      current batch tile
    # c_ref:   (1, R*D)     flattened centers          (constant across steps)
    # s_ref:   (1, R*D)     precomputed -1/(2*w^2)     (constant across steps)
    # out_ref: (TB, R*D)    lane-dense output tile
    x = x_ref[...]                       # (TB, D)
    c = c_ref[...]                       # (1, R*D)
    s = s_ref[...]                       # (1, R*D)

    # Lane replication of x along the rule axis; index r*D + d holds x[b, d],
    # matching the row-major flatten of centers / scale.
    # TODO(synk): if the Mosaic bundle dump shows this tile materializing via
    # a VMEM round trip instead of XLU lane shuffles, replace with pltpu.roll
    # by multiples of D plus selects.
    xt = jnp.tile(x, (1, num_rules))     # (TB, R*D)

    diff = xt - c                        # (TB, R*D)
    out_ref[...] = jnp.exp(diff * diff * s).astype(out_ref.dtype)


def membership_forward(x, centers, widths, *, block_b=None,
                       out_dtype=jnp.float32):
    """Gaussian membership degrees for an ANFIS layer.

    x:       (B, input_dim)             float32
    centers: (num_rules, input_dim)     float32
    widths:  (num_rules, input_dim)     float32  (strictly positive)
    returns: (B, num_rules, input_dim)  out_dtype (default float32)
    """
    B, D = x.shape
    R, Dp = centers.shape
    assert Dp == D and widths.shape == (R, D)
    RD = R * D
    # TODO(synk): if this is reused with R*D not a multiple of 128, pad the
    # flattened rule/feature axis to the next multiple of 128 (lane-dense
    # stores); correctness is unaffected either way since the block equals
    # the full last dim.

    x = x.astype(jnp.float32)
    c_flat = centers.reshape(1, RD).astype(jnp.float32)
    # Hoisted per-call constant: -1/(2*w^2).  Note: if widths underflow so
    # that w*w == 0 in f32 this becomes -inf and exp -> 0, matching the
    # limiting behaviour of the reference divide.
    s_flat = (-0.5 / (widths.astype(jnp.float32)
                      * widths.astype(jnp.float32))).reshape(1, RD)

    out_itemsize = jnp.dtype(out_dtype).itemsize
    b_ceil8 = ((B + 7) // 8) * 8

    if block_b is None:
        # ~4 MiB of output per pipeline buffer, multiple of 8 sublanes.
        tb = max(8, ((4 << 20) // (RD * out_itemsize)) // 8 * 8)
        tb = min(tb, 4096)
        # Megacore (v7x): keep at least 2 grid steps when the batch allows it
        # so the second TensorCore is not idle.
        if B > 8:
            half = max(8, ((B // 2) // 8) * 8)
            tb = min(tb, half)
    else:
        tb = block_b
    tb = min(tb, b_ceil8)

    grid = (pl.cdiv(B, tb),)  # ragged final block: OOB rows masked on write

    cost = pl.CostEstimate(
        flops=3 * B * RD,
        transcendentals=B * RD,
        bytes_accessed=B * D * 4 + 2 * RD * 4 + B * RD * out_itemsize,
    )

    out_flat = pl.pallas_call(
        functools.partial(_membership_kernel, num_rules=R),
        out_shape=jax.ShapeDtypeStruct((B, RD), out_dtype),
        grid_spec=pltpu.PrefetchScalarGridSpec(
            num_scalar_prefetch=0,
            grid=grid,
            in_specs=[
                pl.BlockSpec((tb, D), lambda i: (i, 0)),
                pl.BlockSpec((1, RD), lambda i: (0, 0)),   # constant: no refetch
                pl.BlockSpec((1, RD), lambda i: (0, 0)),   # constant: no refetch
            ],
            out_specs=pl.BlockSpec((tb, RD), lambda i: (i, 0)),
        ),
        compiler_params=pltpu.CompilerParams(
            dimension_semantics=("parallel",),
        ),
        cost_estimate=cost,
    )(x, c_flat, s_flat)

    # Row-major contiguous reshape only (no data movement / no slice copy).
    return out_flat.reshape(B, R, D)


def _reference(x, centers, widths):
    return jnp.exp(-((x[:, None, :] - centers[None]) ** 2)
                   / (2.0 * widths[None] ** 2))


if __name__ == "__main__":
    # Small shapes consistent with the module's constructor args.
    input_dim = 32      # self.input_dim
    num_rules = 8       # self.num_rules

    key = jax.random.PRNGKey(0)
    kx, kc, kw, kx2 = jax.random.split(key, 4)

    # Deterministic "parameters" (a concrete subclass would hold these).
    centers = jax.random.normal(kc, (num_rules, input_dim), dtype=jnp.float32)
    widths = 0.5 + jax.random.uniform(kw, (num_rules, input_dim),
                                      dtype=jnp.float32)  # strictly positive

    # Case 1: batch that fits a single clean tile.
    batch = 8
    x = jax.random.normal(kx, (batch, input_dim), dtype=jnp.float32)
    out = membership_forward(x, centers, widths)
    jax.block_until_ready(out)
    assert out.shape == (batch, num_rules, input_dim)
    assert jnp.allclose(out, _reference(x, centers, widths),
                        atol=1e-5, rtol=1e-5)

    # Case 2: batch not divisible by the tile -> exercises the ragged final
    # block (no wrapper pad, no output slice copy).
    batch2 = 20
    x2 = jax.random.normal(kx2, (batch2, input_dim), dtype=jnp.float32)
    out2 = membership_forward(x2, centers, widths)
    jax.block_until_ready(out2)
    assert out2.shape == (batch2, num_rules, input_dim)
    assert jnp.allclose(out2, _reference(x2, centers, widths),
                        atol=1e-5, rtol=1e-5)

    print("KERNEL_OK")
</pallas_src>

<mosaic_0001>
module attributes {stable_mosaic.version = 11 : i64} {
  func.func @_membership_kernel(%arg0: i32, %arg1: memref<8x32xf32, #tpu.memory_space<vmem>>, %arg2: memref<1x256xf32, #tpu.memory_space<vmem>>, %arg3: memref<1x256xf32, #tpu.memory_space<vmem>>, %arg4: memref<8x256xf32, #tpu.memory_space<vmem>>) attributes {dimension_semantics = [#tpu.dimension_semantics<parallel>], iteration_bounds = array<i64: 1>, scalar_prefetch = 0 : i64, scratch_operands = 0 : i64, tpu.core_type = #tpu.core_type<tc>, window_params = [{transform_indices = @transform_0, window_bounds = array<i64: 8, 32>}, {pipeline_mode = #tpu.pipeline_mode<synchronous>, transform_indices = @transform_1, window_bounds = array<i64: 1, 256>}, {pipeline_mode = #tpu.pipeline_mode<synchronous>, transform_indices = @transform_2, window_bounds = array<i64: 1, 256>}, {transform_indices = @transform_3, window_bounds = array<i64: 8, 256>}]} {
    %c0 = arith.constant 0 : index
    %c0_0 = arith.constant 0 : index
    %0 = vector.load %arg1[%c0, %c0_0] : memref<8x32xf32, #tpu.memory_space<vmem>>, vector<8x32xf32>
    %c0_1 = arith.constant 0 : index
    %c0_2 = arith.constant 0 : index
    %1 = vector.load %arg2[%c0_1, %c0_2] : memref<1x256xf32, #tpu.memory_space<vmem>>, vector<1x256xf32>
    %c0_3 = arith.constant 0 : index
    %c0_4 = arith.constant 0 : index
    %2 = vector.load %arg3[%c0_3, %c0_4] : memref<1x256xf32, #tpu.memory_space<vmem>>, vector<1x256xf32>
    %3 = tpu.concatenate %0, %0, %0, %0, %0, %0, %0, %0 in 1 : vector<8x32xf32>, vector<8x32xf32>, vector<8x32xf32>, vector<8x32xf32>, vector<8x32xf32>, vector<8x32xf32>, vector<8x32xf32>, vector<8x32xf32> -> vector<8x256xf32>
    %4 = vector.broadcast %1 : vector<1x256xf32> to vector<8x256xf32>
    %5 = arith.subf %3, %4 : vector<8x256xf32>
    %6 = arith.mulf %5, %5 : vector<8x256xf32>
    %7 = vector.broadcast %2 : vector<1x256xf32> to vector<8x256xf32>
    %8 = arith.mulf %6, %7 : vector<8x256xf32>
    %9 = math.exp %8 : vector<8x256xf32>
    %c0_5 = arith.constant 0 : index
    %c0_6 = arith.constant 0 : index
    %10 = vector.load %arg4[%c0_5, %c0_6] : memref<8x256xf32, #tpu.memory_space<vmem>>, vector<8x256xf32>
    tpu.vector_store %arg4[%c0_5, %c0_6], %9 {strides = array<i32>} : memref<8x256xf32, #tpu.memory_space<vmem>>, vector<8x256xf32>,
    return
  }
  func.func @transform_0(%arg0: i32) -> (i32, i32) {
    %c0_i32 = arith.constant 0 : i32
    %c0_i32_0 = arith.constant 0 : i32
    return %arg0, %c0_i32 : i32, i32
  }
  func.func @transform_1(%arg0: i32) -> (i32, i32) {
    %c0_i32 = arith.constant 0 : i32
    %c0_i32_0 = arith.constant 0 : i32
    %c0_i32_1 = arith.constant 0 : i32
    return %c0_i32, %c0_i32_0 : i32, i32
  }
  func.func @transform_2(%arg0: i32) -> (i32, i32) {
    %c0_i32 = arith.constant 0 : i32
    %c0_i32_0 = arith.constant 0 : i32
    %c0_i32_1 = arith.constant 0 : i32
    return %c0_i32, %c0_i32_0 : i32, i32
  }
  func.func @transform_3(%arg0: i32) -> (i32, i32) {
    %c0_i32 = arith.constant 0 : i32
    %c0_i32_0 = arith.constant 0 : i32
    return %arg0, %c0_i32 : i32, i32
  }
}

</mosaic_0001>

<llo_original>
// kernel: tpu_custom_call.1
$region0: #{tpu_custom_call.1}
  #allocation0 [shape = 'u32[]', space=smem, size = 0x4, offset = 0x4, fixed_abs, tag = 'smem constant byte address 0x4 - core index']
  #allocation1 [shape = 'u32[144,128]{1,0:T(1,128)}', space=vmem, size = 0x12000, scoped, tag = 'internal scratch']
  %s0 = inlined_call_operand.hbm [shape: f32[8,32], index: 0, kind: input, shape index: {}]
  %s1 = inlined_call_operand.hbm [shape: f32[1,256], index: 1, kind: input, shape index: {}]
  %s2 = inlined_call_operand.vmem [shape: f32[1,256], index: 2, kind: input, shape index: {}]
  %s3 = inlined_call_operand.hbm [shape: f32[8,256], index: 3, kind: output, shape index: {}]
  %s4 = sld [smem:[#allocation0]]
  $region30: #{tpu_custom_call.1} parent=0
    _
  %s6 = ssub.s32 1, %s4
  %s7 = scalar_select 0, %s6, %s4
  $region1: #{tpu_custom_call.1} parent=0
    #allocation2 [shape = 'u8[4096]{0}', space=vmem, size = 0x1000, scoped, tag = 'input window, operand 0, single buffered']
    #allocation3 [shape = 's32[1]{0}', space=sflag, size = 0x4, scoped, tag = 'scoped memory for tpu_custom_call.1']
    #allocation4 [shape = 's32[1]{0}', space=sflag, size = 0x4, scoped, tag = 'scoped memory for tpu_custom_call.1']
    #allocation5 [shape = 'u8[1024]{0}', space=vmem, size = 0x400, scoped, tag = 'input window, operand 1, single buffered']
    #allocation6 [shape = 's32[1]{0}', space=sflag, size = 0x4, scoped, tag = 'scoped memory for tpu_custom_call.1']
    #allocation7 [shape = 'u8[8192]{0}', space=vmem, size = 0x2000, scoped, tag = 'output window, operand 0, single buffered']
    %8 = vsyncpa [#allocation3], 0
    %9 = vsyncpa [#allocation6], 0
    %10 = vsyncpa [#allocation4], 0
    // Predicated region
    $region2: #{tpu_custom_call.1} parent=1 // pred_check
      _
    $region3: #{tpu_custom_call.1} parent=1 // pred_check_branch
      %12 = sbr.rel (0) target = $region5
    $region4: #{tpu_custom_call.1} parent=1 // pred_region
      %s14 = ssub.s32 128, 128
      %15 = vsyncadd [#allocation3], %s14
      %s17 = sshll.u32 [#allocation2], 4
      %s18 = int_to_ptr.vmem [resolvable:$true] %s17
      %20 = dma.hbm_to_vmem [thread:$0]  %s0, 128, %s18, [#allocation3]
    $region5: #{tpu_custom_call.1} parent=1 // pred_fallthru
      _
    // Predicated region
    $region6: #{tpu_custom_call.1} parent=1 // pred_check
      _
    $region7: #{tpu_custom_call.1} parent=1 // pred_check_branch
      %22 = sbr.rel (0) target = $region9
    $region8: #{tpu_custom_call.1} parent=1 // pred_region
      %s24 = ssub.s32 32, 32
      %25 = vsyncadd [#allocation6], %s24
      %s27 = sshll.u32 [#allocation5], 4
      %s28 = int_to_ptr.vmem [resolvable:$true] %s27
      %30 = dma.hbm_to_vmem [thread:$0]  %s1, 32, %s28, [#allocation6]
    $region9: #{tpu_custom_call.1} parent=1 // pred_fallthru
      _
    // Predicated region
    $region10: #{tpu_custom_call.1} parent=1 // pred_check
      _
    $region11: #{tpu_custom_call.1} parent=1 // pred_check_branch
      %32 = sbr.rel (0) target = $region13
    $region12: #{tpu_custom_call.1} parent=1 // pred_region
      _
    $region13: #{tpu_custom_call.1} parent=1 // pred_fallthru
      _
    // Predicated region
    $region14: #{tpu_custom_call.1} parent=1 // pred_check
      _
    $region15: #{tpu_custom_call.1} parent=1 // pred_check_branch
      %34 = sbr.rel (0) target = $region17
    $region16: #{tpu_custom_call.1} parent=1 // pred_region
      %35 = dma.done [#allocation3], 128
    $region17: #{tpu_custom_call.1} parent=1 // pred_fallthru
      _
    // Predicated region
    $region18: #{tpu_custom_call.1} parent=1 // pred_check
      _
    $region19: #{tpu_custom_call.1} parent=1 // pred_check_branch
      %37 = sbr.rel (0) target = $region21
    $region20: #{tpu_custom_call.1} parent=1 // pred_region
      %38 = dma.done [#allocation6], 32
    $region21: #{tpu_custom_call.1} parent=1 // pred_fallthru
      _
    %v39 = vld [vmem:[#allocation2] sm:$0xff]
    %v40 = vld [vmem:[#allocation5] sm:$0x3]
    %v41 = vld [vmem:[%s2] sm:$0x3]
    %43 = vrot.lane.b32.xlu0 %v39, 32
    %v44 = vpop.permute.xlu0 %43
    %46 = vrot.lane.b32.xlu0 %v39, 64
    %v47 = vpop.permute.xlu0 %46
    %49 = vrot.lane.b32.xlu0 %v39, 96
    %v50 = vpop.permute.xlu0 %49
    %vm52 = vcmask 261120
    %v53 = vsel %vm52, %v39, %v44
    %vm54 = vcmask 523264
    %v55 = vsel %vm54, %v53, %v47
    %vm56 = vcmask 785408
    %v57 = vsel %vm56, %v55, %v50
    %v59 = vlaneseq
    %v60 = vshrl.u32 %v59, 7
    %v61 = vsub.s32 0, %v60
    %v62 = vrot.slane %v40, %v61
    %v63 = vlaneseq
    %v64 = vshrl.u32 %v63, 7
    %v65 = vsub.s32 1, %v64
    %v66 = vrot.slane %v40, %v65
    %v69 = vsub.f32 %v57, %v62
    %v70 = vsub.f32 %v57, %v66
    %v71 = vmul.f32 %v69, %v69
    %v72 = vmul.f32 %v70, %v70
    %v74 = vlaneseq
    %v75 = vshrl.u32 %v74, 7
    %v76 = vsub.s32 0, %v75
    %v77 = vrot.slane %v41, %v76
    %v78 = vlaneseq
    %v79 = vshrl.u32 %v78, 7
    %v80 = vsub.s32 1, %v79
    %v81 = vrot.slane %v41, %v80
    %v84 = vmul.f32 %v71, %v77
    %v85 = vmul.f32 %v72, %v81
    %v86 = vmul.f32 %v84, 1.442695
    %v87 = vpow.pop %v86
    %v88 = vmul.f32 %v85, 1.442695
    %v89 = vpow.pop %v88
    %90 = vst [vmem:[#allocation7] sm:$0xff] %v87
    %91 = vst [vmem:[#allocation7 + $0x8] sm:$0xff] %v89
    // Predicated region
    $region22: #{tpu_custom_call.1} parent=1 // pred_check
      _
    $region23: #{tpu_custom_call.1} parent=1 // pred_check_branch
      %93 = sbr.rel (0) target = $region25
    $region24: #{tpu_custom_call.1} parent=1 // pred_region
      %s95 = ssub.s32 256, 256
      %96 = vsyncadd [#allocation4], %s95
      %s98 = sshll.u32 [#allocation7], 4
      %s99 = int_to_ptr.vmem [resolvable:$true] %s98
      %101 = dma.vmem_to_hbm [thread:$0]  %s99, 256, %s3, [#allocation4]
    $region25: #{tpu_custom_call.1} parent=1 // pred_fallthru
      _
    // Predicated region
    $region26: #{tpu_custom_call.1} parent=1 // pred_check
      _
    $region27: #{tpu_custom_call.1} parent=1 // pred_check_branch
      %103 = sbr.rel (0) target = $region29
    $region28: #{tpu_custom_call.1} parent=1 // pred_region
      %104 = dma.done [#allocation4], 256
    $region29: #{tpu_custom_call.1} parent=1 // pred_fallthru
      _
    %105 = vsyncpa [#allocation3], 1
    %106 = vsyncpa [#allocation6], 1
    %107 = vsyncpa [#allocation4], 1

</llo_original>
